<compile_context>
chip_gen: v7x
topology: tpu7x:2x2x1
jax: 0.10.0
libtpu: 0.0.40
codegen_flags: <defaults>
</compile_context>

<pallas_src>
import functools

import jax
import jax.numpy as jnp
from jax.experimental import pallas as pl
from jax.experimental.pallas import tpu as pltpu


def top1_max_kernel(x_ref, eye_ref, out_ref, *, tm, valid_rows, single_tile):
    i = pl.program_id(0)
    x = x_ref[...].astype(jnp.float32)                    # (TM, Bp) row stripe

    # numerically stable softmax over dim=1 (lanes)
    m = jnp.max(x, axis=1, keepdims=True)                 # (TM, 1)
    e = jnp.exp(x - m)                                    # (TM, Bp)
    denom = jnp.sum(e, axis=1, keepdims=True)             # (TM, 1)
    inv = pl.reciprocal(denom, approx=True)
    inv = inv * (2.0 - denom * inv)                       # 1 Newton step on (TM,1): ~free
    sm = e * inv

    # Diagonal of this row stripe: it lives in columns [i*TM, i*TM + TM) of the
    # stripe itself — slice it out (128-aligned dynamic lane offset) instead of
    # DMA-ing a second copy from HBM.  Reduce against a tiny f32 identity.
    if single_tile:
        xd = x                                            # block is already (TM, TM)
    else:
        start = pl.multiple_of(i * tm, tm)
        xd = x_ref[:, pl.ds(start, tm)].astype(jnp.float32)
    diag_col = jnp.sum(xd * eye_ref[...], axis=1, keepdims=True)   # (TM, 1)

    # sigmoid(x - diag) reusing the softmax exponentials:
    #   sigmoid(x - d) = e / (e + exp(d - m)),   d <= m  so  exp(d - m) <= 1
    ed = jnp.maximum(jnp.exp(diag_col - m), 1e-30)        # (TM, 1); clamp avoids 0/0
    sig1 = e * pl.reciprocal(e + ed, approx=True)

    # sigmoid(x^2) = 0.5 * (tanh(x^2 / 2) + 1)  ->  one EUP op
    sig2 = 0.5 * jnp.tanh(0.5 * (x * x)) + 0.5

    val = sm * (sig1 + sig2)
    s_row = jnp.sum(val, axis=1, keepdims=True)           # (TM, 1)

    if valid_rows is not None:                            # mask padded rows
        gr = i * tm + jax.lax.broadcasted_iota(jnp.int32, s_row.shape, 0)
        s_row = jnp.where(gr < valid_rows, s_row, 0.0)

    # per-tile partial sum, replicated over 128 lanes (lane-dense store)
    s_all = jnp.sum(s_row, axis=0, keepdims=True)         # (1, 1)
    out_ref[...] = jnp.broadcast_to(s_all, out_ref.shape)


def _choose_tile(B, itemsize):
    # VMEM-aware row-tile choice: the double-buffered (TM, B) input stripe plus
    # ~3 full-width f32 temporaries must stay well under the scoped VMEM budget
    # (v7x: 64 MiB physical / 32 MiB default scoped).  Also require >= 2 tiles
    # so the "parallel" grid axis can feed both v7x TensorCores.
    budget = 24 * 1024 * 1024
    for tm_cand in (256, 128):
        if B < 2 * tm_cand:
            continue
        footprint = 2 * tm_cand * B * itemsize + 3 * tm_cand * B * 4
        if footprint <= budget:
            return tm_cand
    # TODO(synk): for very large B (f32 B >~ 10k) even TM=128 gets tight in the
    # 32 MiB scoped VMEM; raise vmem_limit_bytes there if that case is hit.
    return 128


def top1_max_loss(logit, *, tm=None):
    B, B2 = logit.shape
    assert B == B2, "TOP1_max expects a square logit matrix"

    if B < 256 and tm is None:
        # Small problem: one full-array block (always a legal tile shape),
        # no padding, diag sub-block == the whole block, no dynamic slicing.
        TM, n_tiles, Bp = B, 1, B
        x, valid_rows, single_tile = logit, None, True
    else:
        TM = tm if tm is not None else _choose_tile(B, logit.dtype.itemsize)
        n_tiles = pl.cdiv(B, TM)
        Bp = n_tiles * TM
        single_tile = n_tiles == 1
        if Bp != B:
            # Pad rows+cols with a large negative value: exp() underflows to 0
            # for real rows, and padded rows are masked out in-kernel.
            x = jnp.pad(logit, ((0, Bp - B), (0, Bp - B)), constant_values=-1e30)
            valid_rows = B
        else:
            x, valid_rows = logit, None

    kernel = functools.partial(
        top1_max_kernel, tm=TM, valid_rows=valid_rows, single_tile=single_tile)

    partials = pl.pallas_call(
        kernel,
        out_shape=jax.ShapeDtypeStruct((1, n_tiles * 128), jnp.float32),
        grid=(n_tiles,),
        in_specs=[
            pl.BlockSpec((TM, Bp), lambda i: (i, 0)),   # full row stripe (native dtype)
            pl.BlockSpec((TM, TM), lambda i: (0, 0)),   # tiny f32 identity, fetched once
        ],
        out_specs=pl.BlockSpec((1, 128), lambda i: (0, i)),
        compiler_params=pltpu.CompilerParams(
            dimension_semantics=("parallel",),
            vmem_limit_bytes=32 * 1024 * 1024,
        ),
    )(x, jnp.eye(TM, dtype=jnp.float32))

    per_tile = partials.reshape(n_tiles, 128)[:, 0]       # one scalar per tile
    return jnp.sum(per_tile) / (B * B)


def top1_max_ref(logit):
    # pure-JAX reference mirroring the PyTorch forward
    lg = logit.astype(jnp.float32)
    sm = jax.nn.softmax(lg, axis=1)
    diag = jnp.diag(lg)[:, None]
    diff = -(diag - lg)
    return jnp.mean(sm * (jax.nn.sigmoid(diff) + jax.nn.sigmoid(lg ** 2)))


if __name__ == "__main__":
    key = jax.random.PRNGKey(0)
    # B=256 exercises the 2-tile "parallel" path; B=64 the single-block path;
    # B=300 the pad-and-mask path (non-multiple-of-TM batch).
    for B in (256, 64, 300):
        key, sub = jax.random.split(key)
        logit = jax.random.normal(sub, (B, B), dtype=jnp.float32)
        loss = top1_max_loss(logit)
        jax.block_until_ready(loss)
        ref = top1_max_ref(logit)
        assert jnp.allclose(loss, ref, rtol=1e-3, atol=1e-5), (B, float(loss), float(ref))
    print("KERNEL_OK")
</pallas_src>

<mosaic_0001>
module attributes {stable_mosaic.version = 11 : i64} {
  func.func @top1_max_kernel(%arg0: i32, %arg1: memref<128x256xf32, #tpu.memory_space<vmem>>, %arg2: memref<128x128xf32, #tpu.memory_space<vmem>>, %arg3: memref<1x128xf32, #tpu.memory_space<vmem>>) attributes {dimension_semantics = [#tpu.dimension_semantics<parallel>], iteration_bounds = array<i64: 2>, scalar_prefetch = 0 : i64, scratch_operands = 0 : i64, tpu.core_type = #tpu.core_type<tc>, window_params = [{transform_indices = @transform_0, window_bounds = array<i64: 128, 256>}, {pipeline_mode = #tpu.pipeline_mode<synchronous>, transform_indices = @transform_1, window_bounds = array<i64: 128, 128>}, {transform_indices = @transform_2, window_bounds = array<i64: 1, 128>}]} {
    %c0 = arith.constant 0 : index
    %c0_0 = arith.constant 0 : index
    %0 = vector.load %arg1[%c0, %c0_0] : memref<128x256xf32, #tpu.memory_space<vmem>>, vector<128x256xf32>
    %cst = arith.constant dense<0xFF800000> : vector<128xf32>
    %1 = vector.multi_reduction <maximumf>, %0, %cst [1] : vector<128x256xf32> to vector<128xf32>
    %2 = vector.shape_cast %1 : vector<128xf32> to vector<128x1xf32>
    %3 = vector.broadcast %2 : vector<128x1xf32> to vector<128x256xf32>
    %4 = arith.subf %0, %3 : vector<128x256xf32>
    %5 = math.exp %4 : vector<128x256xf32>
    %cst_1 = arith.constant dense<0.000000e+00> : vector<128xf32>
    %6 = vector.multi_reduction <add>, %5, %cst_1 [1] : vector<128x256xf32> to vector<128xf32>
    %7 = vector.shape_cast %6 : vector<128xf32> to vector<128x1xf32>
    %8 = tpu.reciprocal %7 {approx = true} : vector<128x1xf32> -> vector<128x1xf32>
    %9 = arith.mulf %7, %8 : vector<128x1xf32>
    %cst_2 = arith.constant 2.000000e+00 : f32
    %10 = vector.broadcast %cst_2 : f32 to vector<128x1xf32>
    %11 = arith.subf %10, %9 : vector<128x1xf32>
    %12 = arith.mulf %8, %11 : vector<128x1xf32>
    %13 = vector.broadcast %12 : vector<128x1xf32> to vector<128x256xf32>
    %14 = arith.mulf %5, %13 : vector<128x256xf32>
    %c128_i32 = arith.constant 128 : i32
    %15 = arith.muli %arg0, %c128_i32 : i32
    %16 = tpu.assume_multiple %15, 128 : i32
    %c0_3 = arith.constant 0 : index
    %17 = arith.index_cast %16 : i32 to index
    %18 = vector.load %arg1[%c0_3, %17] : memref<128x256xf32, #tpu.memory_space<vmem>>, vector<128x128xf32>
    %c0_4 = arith.constant 0 : index
    %c0_5 = arith.constant 0 : index
    %19 = vector.load %arg2[%c0_4, %c0_5] : memref<128x128xf32, #tpu.memory_space<vmem>>, vector<128x128xf32>
    %20 = arith.mulf %18, %19 : vector<128x128xf32>
    %cst_6 = arith.constant dense<0.000000e+00> : vector<128xf32>
    %21 = vector.multi_reduction <add>, %20, %cst_6 [1] : vector<128x128xf32> to vector<128xf32>
    %22 = vector.shape_cast %21 : vector<128xf32> to vector<128x1xf32>
    %23 = arith.subf %22, %2 : vector<128x1xf32>
    %24 = math.exp %23 : vector<128x1xf32>
    %cst_7 = arith.constant 1.000000e-30 : f32
    %25 = vector.broadcast %cst_7 : f32 to vector<128x1xf32>
    %26 = arith.maximumf %24, %25 : vector<128x1xf32>
    %27 = vector.broadcast %26 : vector<128x1xf32> to vector<128x256xf32>
    %28 = arith.addf %5, %27 : vector<128x256xf32>
    %29 = tpu.reciprocal %28 {approx = true} : vector<128x256xf32> -> vector<128x256xf32>
    %30 = arith.mulf %5, %29 : vector<128x256xf32>
    %31 = arith.mulf %0, %0 : vector<128x256xf32>
    %cst_8 = arith.constant 5.000000e-01 : f32
    %32 = vector.broadcast %cst_8 : f32 to vector<128x256xf32>
    %33 = arith.mulf %32, %31 : vector<128x256xf32>
    %34 = math.tanh %33 : vector<128x256xf32>
    %cst_9 = arith.constant 5.000000e-01 : f32
    %35 = vector.broadcast %cst_9 : f32 to vector<128x256xf32>
    %36 = arith.mulf %35, %34 : vector<128x256xf32>
    %cst_10 = arith.constant 5.000000e-01 : f32
    %37 = vector.broadcast %cst_10 : f32 to vector<128x256xf32>
    %38 = arith.addf %36, %37 : vector<128x256xf32>
    %39 = arith.addf %30, %38 : vector<128x256xf32>
    %40 = arith.mulf %14, %39 : vector<128x256xf32>
    %cst_11 = arith.constant dense<0.000000e+00> : vector<128xf32>
    %41 = vector.multi_reduction <add>, %40, %cst_11 [1] : vector<128x256xf32> to vector<128xf32>
    %42 = vector.shape_cast %41 : vector<128xf32> to vector<128x1xf32>
    %cst_12 = arith.constant dense<0.000000e+00> : vector<1xf32>
    %43 = vector.multi_reduction <add>, %42, %cst_12 [0] : vector<128x1xf32> to vector<1xf32>
    %44 = vector.shape_cast %43 : vector<1xf32> to vector<1x1xf32>
    %45 = vector.shape_cast %44 : vector<1x1xf32> to vector<1x1xf32>
    %46 = vector.broadcast %45 : vector<1x1xf32> to vector<1x128xf32>
    %c0_13 = arith.constant 0 : index
    %c0_14 = arith.constant 0 : index
    %47 = vector.load %arg3[%c0_13, %c0_14] : memref<1x128xf32, #tpu.memory_space<vmem>>, vector<1x128xf32>
    tpu.vector_store %arg3[%c0_13, %c0_14], %46 {strides = array<i32>} : memref<1x128xf32, #tpu.memory_space<vmem>>, vector<1x128xf32>,
    return
  }
  func.func @transform_0(%arg0: i32) -> (i32, i32) {
    %c0_i32 = arith.constant 0 : i32
    %c0_i32_0 = arith.constant 0 : i32
    return %arg0, %c0_i32 : i32, i32
  }
  func.func @transform_1(%arg0: i32) -> (i32, i32) {
    %c0_i32 = arith.constant 0 : i32
    %c0_i32_0 = arith.constant 0 : i32
    %c0_i32_1 = arith.constant 0 : i32
    return %c0_i32, %c0_i32_0 : i32, i32
  }
  func.func @transform_2(%arg0: i32) -> (i32, i32) {
    %c0_i32 = arith.constant 0 : i32
    %c0_i32_0 = arith.constant 0 : i32
    return %c0_i32, %arg0 : i32, i32
  }
}

</mosaic_0001>

<llo_original>
// kernel: tpu_custom_call.1
$region0: #{tpu_custom_call.1}
  #allocation0 [shape = 'u32[]', space=smem, size = 0x4, offset = 0x4, fixed_abs, tag = 'smem constant byte address 0x4 - core index']
  #allocation1 [shape = 'u32[144,128]{1,0:T(1,128)}', space=vmem, size = 0x12000, scoped, tag = 'internal scratch']
  %s0 = inlined_call_operand.hbm [shape: f32[256,256], index: 0, kind: input, shape index: {}]
  %s1 = inlined_call_operand.hbm [shape: f32[128,128], index: 1, kind: input, shape index: {}]
  %s2 = inlined_call_operand.hbm [shape: f32[1,256], index: 2, kind: output, shape index: {}]
  %s3 = sld [smem:[#allocation0]]
  $region49: #{tpu_custom_call.1} parent=0
    _
  %s5 = ssub.s32 1, %s3
  %s6 = scalar_select 0, %s5, %s3
  $region1: #{tpu_custom_call.1} parent=0
    #allocation2 [shape = 'u8[262144]{0}', space=vmem, size = 0x40000, scoped, tag = 'input window, operand 0']
    #allocation3 [shape = 's32[2]{0}', space=sflag, size = 0x8, scoped, tag = 'scoped memory for tpu_custom_call.1']
    #allocation4 [shape = 's32[2]{0}', space=sflag, size = 0x8, scoped, tag = 'scoped memory for tpu_custom_call.1']
    #allocation5 [shape = 'u8[65536]{0}', space=vmem, size = 0x10000, scoped, tag = 'input window, operand 1, single buffered']
    #allocation6 [shape = 's32[1]{0}', space=sflag, size = 0x4, scoped, tag = 'scoped memory for tpu_custom_call.1']
    #allocation7 [shape = 'u8[1024]{0}', space=vmem, size = 0x400, scoped, tag = 'output window, operand 0']
    %7 = vsyncpa [#allocation3], 0
    %s8 = scalar_lea.sflag [#allocation3], 1
    %9 = vsyncpa %s8, 0
    %10 = vsyncpa [#allocation6], 0
    %11 = vsyncpa [#allocation4], 0
    %s12 = scalar_lea.sflag [#allocation4], 1
    %13 = vsyncpa %s12, 0
    loop: start=0, step=1, limit=4
    $region2: #{tpu_custom_call.1} parent=1 // loop_pre_header
      _
    $region3: #{tpu_custom_call.1} parent=1 // loop_header
      %s15 = sphi 0, %s19
      %p16 = scmp.ge.s32.totalorder %s15, 4
      %s25 = sphi 0, %s27
      %s28 = sphi 0, %s25
      %s29 = sphi 0, %s28
      %s45 = sphi 0, %s29
      %s49 = sphi 0, %s49
      %s51 = sphi 0, %s49
      %s52 = sphi 0, %s51
      %s66 = sphi 0, %s52
      %s72 = sphi 0, %s74
      %s75 = sphi 0, %s72
      %s76 = sphi 0, %s75
      %s92 = sphi 0, %s76
    $region4: #{tpu_custom_call.1} parent=1 // loop_header_branch
      %18 = sbr.rel (%p16) target = $region8
    $region5: #{tpu_custom_call.1} parent=1 // loop_body
      %s20 = ssub.s32 %s15, 1
      %s21 = ssub.s32 %s15, 2
      %s22 = sadd.s32 %s15, 1
      %s23 = ssub.s32 %s15, %s22
      %p24 = scmp.eq.s32.totalorder %s23, 0
      %s26 = sadd.s32 %s25, 1
      %s27 = scalar_select %p24, %s25, %s26
      %p30 = pneg %p24
      %p31 = scmp.eq.s32.totalorder %s15, 1
      %p32 = por %p30, %p31
      %p33 = scmp.ne.s32.totalorder %s25, %s28
      %p34 = scmp.eq.s32.totalorder %s15, 0
      %p35 = por %p33, %p34
      %p36 = scmp.ne.s32.totalorder %s25, %s28
      %p37 = scmp.eq.s32.totalorder %s20, 1
      %p38 = por %p36, %p37
      %p39 = scmp.ne.s32.totalorder %s28, %s29
      %p40 = scmp.eq.s32.totalorder %s20, 0
      %p41 = por %p39, %p40
      %p42 = scmp.ne.s32.totalorder %s28, %s29
      %p43 = scmp.eq.s32.totalorder %s21, 1
      %p44 = por %p42, %p43
      %p46 = scmp.ne.s32.totalorder %s29, %s45
      %p47 = scmp.eq.s32.totalorder %s21, 0
      %p48 = por %p46, %p47
      %s50 = sadd.s32 %s49, 1
      %p53 = scmp.eq.s32.totalorder %s15, 1
      %p54 = scmp.ne.s32.totalorder %s49, %s51
      %p55 = scmp.eq.s32.totalorder %s15, 0
      %p56 = por %p54, %p55
      %p57 = scmp.ne.s32.totalorder %s49, %s51
      %p58 = scmp.eq.s32.totalorder %s20, 1
      %p59 = por %p57, %p58
      %p60 = scmp.ne.s32.totalorder %s51, %s52
      %p61 = scmp.eq.s32.totalorder %s20, 0
      %p62 = por %p60, %p61
      %p63 = scmp.ne.s32.totalorder %s51, %s52
      %p64 = scmp.eq.s32.totalorder %s21, 1
      %p65 = por %p63, %p64
      %p67 = scmp.ne.s32.totalorder %s52, %s66
      %p68 = scmp.eq.s32.totalorder %s21, 0
      %p69 = por %p67, %p68
      %s70 = ssub.s32 %s15, %s22
      %p71 = scmp.eq.s32.totalorder %s70, 0
      %s73 = sadd.s32 %s72, 1
      %s74 = scalar_select %p71, %s72, %s73
      %p77 = pneg %p71
      %p78 = scmp.eq.s32.totalorder %s15, 1
      %p79 = por %p77, %p78
      %p80 = scmp.ne.s32.totalorder %s72, %s75
      %p81 = scmp.eq.s32.totalorder %s15, 0
      %p82 = por %p80, %p81
      %p83 = scmp.ne.s32.totalorder %s72, %s75
      %p84 = scmp.eq.s32.totalorder %s20, 1
      %p85 = por %p83, %p84
      %p86 = scmp.ne.s32.totalorder %s75, %s76
      %p87 = scmp.eq.s32.totalorder %s20, 0
      %p88 = por %p86, %p87
      %p89 = scmp.ne.s32.totalorder %s75, %s76
      %p90 = scmp.eq.s32.totalorder %s21, 1
      %p91 = por %p89, %p90
      %p93 = scmp.ne.s32.totalorder %s76, %s92
      %p94 = scmp.eq.s32.totalorder %s21, 0
      %p95 = por %p93, %p94
      %p96 = scmp.le.s32.totalorder 1, %s15
      %p97 = scmp.lt.s32.totalorder %s15, 3
      %p98 = pnand %p96, %p97
      %p99 = pneg %p98
      // Predicated region
      $region9: #{tpu_custom_call.1} parent=5 // pred_check
        _
      $region10: #{tpu_custom_call.1} parent=5 // pred_check_branch
        %101 = sbr.rel (%p98) target = $region12
      $region11: #{tpu_custom_call.1} parent=5 // pred_region
        %s102 = ssub.s32 %s15, 1
        // Predicated region
        $region13: #{tpu_custom_call.1} parent=11 // pred_check
          %p103 = pneg %p62
        $region14: #{tpu_custom_call.1} parent=11 // pred_check_branch
          %105 = sbr.rel (%p103) target = $region16
        $region15: #{tpu_custom_call.1} parent=11 // pred_region
          %s107 = ssub.s32 2048, 2048
          %108 = vsyncadd [#allocation6], %s107
          %s109 = sshll.u32 [#allocation5], 4
          %s110 = int_to_ptr.vmem [resolvable:$true] %s109
          %115 = dma.hbm_to_vmem [thread:$0]  %s1, 2048, %s110, [#allocation6], 128, 128, 8
        $region16: #{tpu_custom_call.1} parent=11 // pred_fallthru
          _
      $region12: #{tpu_custom_call.1} parent=5 // pred_fallthru
        _
      %p116 = scmp.lt.s32.totalorder %s15, 2
      // Predicated region
      $region17: #{tpu_custom_call.1} parent=5 // pred_check
        %p117 = pneg %p116
      $region18: #{tpu_custom_call.1} parent=5 // pred_check_branch
        %119 = sbr.rel (%p117) target = $region20
      $region19: #{tpu_custom_call.1} parent=5 // pred_region
        // Predicated region
        $region21: #{tpu_custom_call.1} parent=19 // pred_check
          %p120 = pneg %p35
        $region22: #{tpu_custom_call.1} parent=19 // pred_check_branch
          %122 = sbr.rel (%p120) target = $region24
        $region23: #{tpu_custom_call.1} parent=19 // pred_region
          %s123 = sand.u32 %s25, 1
          %s124 = scalar_lea.sflag [#allocation3], %s123
          %s125 = sand.u32 %s25, 1
          %s126 = smul.addr %s125, 256
          %s127 = scalar_lea.vmem [#allocation2], %s126
          %s128 = smul.u32 16, %s15
          %s130 = ssub.s32 4096, 4096
          %131 = vsyncadd %s124, %s130
          %s132 = smul.addr %s128, 2
          %s133 = smul.addr %s132, 128
          %s134 = scalar_lea.hbm %s0, %s133
          %s135 = sshll.u32 %s127, 4
          %s136 = int_to_ptr.vmem [resolvable:$true] %s135
          %141 = dma.hbm_to_vmem [thread:$0]  %s134, 4096, %s136, %s124, 256, 256, 16
        $region24: #{tpu_custom_call.1} parent=19 // pred_fallthru
          _
      $region20: #{tpu_custom_call.1} parent=5 // pred_fallthru
        _
      %p142 = scmp.le.s32.totalorder 1, %s15
      %p143 = scmp.lt.s32.totalorder %s15, 3
      %p144 = pnand %p142, %p143
      %p145 = pneg %p144
      // Predicated region
      $region25: #{tpu_custom_call.1} parent=5 // pred_check
        _
      $region26: #{tpu_custom_call.1} parent=5 // pred_check_branch
        %147 = sbr.rel (%p144) target = $region28
      $region27: #{tpu_custom_call.1} parent=5 // pred_region
        %s148 = ssub.s32 %s15, 1
        %s149 = sand.u32 %s28, 1
        %s150 = scalar_lea.sflag [#allocation3], %s149
        %s151 = sand.u32 %s28, 1
        %s152 = smul.addr %s151, 256
        %s153 = scalar_lea.vmem [#allocation2], %s152
        // Predicated region
        $region29: #{tpu_custom_call.1} parent=27 // pred_check
          %p154 = pneg %p41
        $region30: #{tpu_custom_call.1} parent=27 // pred_check_branch
          %156 = sbr.rel (%p154) target = $region32
        $region31: #{tpu_custom_call.1} parent=27 // pred_region
          %157 = dma.done %s150, 4096
        $region32: #{tpu_custom_call.1} parent=27 // pred_fallthru
          _
        // Predicated region
        $region33: #{tpu_custom_call.1} parent=27 // pred_check
          %p158 = pneg %p62
        $region34: #{tpu_custom_call.1} parent=27 // pred_check_branch
          %160 = sbr.rel (%p158) target = $region36
        $region35: #{tpu_custom_call.1} parent=27 // pred_region
          %161 = dma.done [#allocation6], 2048
        $region36: #{tpu_custom_call.1} parent=27 // pred_fallthru
          _
        %s162 = sand.u32 %s28, 1
        %s163 = scalar_lea.sflag [#allocation3], %s162
        %s164 = sand.u32 %s28, 1
        %s165 = smul.addr %s164, 256
        %s166 = scalar_lea.vmem [#allocation2], %s165
        %p167 = pneg %p41
        %p168 = pneg %p38
        %p169 = pneg %p62
        %p170 = pneg %p59
        %p171 = pneg %p88
        %p172 = pneg %p85
        %s173 = sand.u32 %s75, 1
        %s174 = scalar_lea.sflag [#allocation4], %s173
        %s175 = sand.u32 %s75, 1
        %s176 = scalar_lea.vmem [#allocation7], %s175
        %s177 = smul.u32 16, %s20
        %v178 = vld [vmem:[%s153] sm:$0xff]
        %v179 = vld [vmem:[%s153 + $0x8] sm:$0xff]
        %v180 = vld [vmem:[%s153 + $0x10] sm:$0xff]
        %v181 = vld [vmem:[%s153 + $0x18] sm:$0xff]
        %v182 = vld [vmem:[%s153 + $0x20] sm:$0xff]
        %v183 = vld [vmem:[%s153 + $0x28] sm:$0xff]
        %v184 = vld [vmem:[%s153 + $0x30] sm:$0xff]
        %v185 = vld [vmem:[%s153 + $0x38] sm:$0xff]
        %v186 = vld [vmem:[%s153 + $0x40] sm:$0xff]
        %v187 = vld [vmem:[%s153 + $0x48] sm:$0xff]
        %v188 = vld [vmem:[%s153 + $0x50] sm:$0xff]
        %v189 = vld [vmem:[%s153 + $0x58] sm:$0xff]
        %v190 = vld [vmem:[%s153 + $0x60] sm:$0xff]
        %v191 = vld [vmem:[%s153 + $0x68] sm:$0xff]
        %v192 = vld [vmem:[%s153 + $0x70] sm:$0xff]
        %v193 = vld [vmem:[%s153 + $0x78] sm:$0xff]
        %v194 = vld [vmem:[%s153 + $0x80] sm:$0xff]
        %v195 = vld [vmem:[%s153 + $0x88] sm:$0xff]
        %v196 = vld [vmem:[%s153 + $0x90] sm:$0xff]
        %v197 = vld [vmem:[%s153 + $0x98] sm:$0xff]
        %v198 = vld [vmem:[%s153 + $0xa0] sm:$0xff]
        %v199 = vld [vmem:[%s153 + $0xa8] sm:$0xff]
        %v200 = vld [vmem:[%s153 + $0xb0] sm:$0xff]
        %v201 = vld [vmem:[%s153 + $0xb8] sm:$0xff]
        %v202 = vld [vmem:[%s153 + $0xc0] sm:$0xff]
        %v203 = vld [vmem:[%s153 + $0xc8] sm:$0xff]
        %v204 = vld [vmem:[%s153 + $0xd0] sm:$0xff]
        %v205 = vld [vmem:[%s153 + $0xd8] sm:$0xff]
        %v206 = vld [vmem:[%s153 + $0xe0] sm:$0xff]
        %v207 = vld [vmem:[%s153 + $0xe8] sm:$0xff]
        %v208 = vld [vmem:[%s153 + $0xf0] sm:$0xff]
        %v209 = vld [vmem:[%s153 + $0xf8] sm:$0xff]
        %v210 = vmax.f32 %v178, %v179
        %211 = vmax.xlane.f32.xlu0 %v210
        %v212 = vpop.xlane.xlu0 %211
        %v213 = vmax.f32 %v180, %v181
        %214 = vmax.xlane.f32.xlu0 %v213
        %v215 = vpop.xlane.xlu0 %214
        %v216 = vmax.f32 %v182, %v183
        %217 = vmax.xlane.f32.xlu0 %v216
        %v218 = vpop.xlane.xlu0 %217
        %v219 = vmax.f32 %v184, %v185
        %220 = vmax.xlane.f32.xlu0 %v219
        %v221 = vpop.xlane.xlu0 %220
        %v222 = vmax.f32 %v186, %v187
        %223 = vmax.xlane.f32.xlu0 %v222
        %v224 = vpop.xlane.xlu0 %223
        %v225 = vmax.f32 %v188, %v189
        %226 = vmax.xlane.f32.xlu0 %v225
        %v227 = vpop.xlane.xlu0 %226
        %v228 = vmax.f32 %v190, %v191
        %229 = vmax.xlane.f32.xlu0 %v228
        %v230 = vpop.xlane.xlu0 %229
        %v231 = vmax.f32 %v192, %v193
        %232 = vmax.xlane.f32.xlu0 %v231
        %v233 = vpop.xlane.xlu0 %232
        %v234 = vmax.f32 %v194, %v195
        %235 = vmax.xlane.f32.xlu0 %v234
        %v236 = vpop.xlane.xlu0 %235
        %v237 = vmax.f32 %v196, %v197
        %238 = vmax.xlane.f32.xlu0 %v237
        %v239 = vpop.xlane.xlu0 %238
        %v240 = vmax.f32 %v198, %v199
        %241 = vmax.xlane.f32.xlu0 %v240
        %v242 = vpop.xlane.xlu0 %241
        %v243 = vmax.f32 %v200, %v201
        %244 = vmax.xlane.f32.xlu0 %v243
        %v245 = vpop.xlane.xlu0 %244
        %v246 = vmax.f32 %v202, %v203
        %247 = vmax.xlane.f32.xlu0 %v246
        %v248 = vpop.xlane.xlu0 %247
        %v249 = vmax.f32 %v204, %v205
        %250 = vmax.xlane.f32.xlu0 %v249
        %v251 = vpop.xlane.xlu0 %250
        %v252 = vmax.f32 %v206, %v207
        %253 = vmax.xlane.f32.xlu0 %v252
        %v254 = vpop.xlane.xlu0 %253
        %v255 = vmax.f32 %v208, %v209
        %256 = vmax.xlane.f32.xlu0 %v255
        %v257 = vpop.xlane.xlu0 %256
        %v258 = vsub.f32 %v178, %v212
        %v259 = vsub.f32 %v179, %v212
        %v260 = vsub.f32 %v180, %v215
        %v261 = vsub.f32 %v181, %v215
        %v262 = vsub.f32 %v182, %v218
        %v263 = vsub.f32 %v183, %v218
        %v264 = vsub.f32 %v184, %v221
        %v265 = vsub.f32 %v185, %v221
        %v266 = vsub.f32 %v186, %v224
        %v267 = vsub.f32 %v187, %v224
        %v268 = vsub.f32 %v188, %v227
        %v269 = vsub.f32 %v189, %v227
        %v270 = vsub.f32 %v190, %v230
        %v271 = vsub.f32 %v191, %v230
        %v272 = vsub.f32 %v192, %v233
        %v273 = vsub.f32 %v193, %v233
        %v274 = vsub.f32 %v194, %v236
        %v275 = vsub.f32 %v195, %v236
        %v276 = vsub.f32 %v196, %v239
        %v277 = vsub.f32 %v197, %v239
        %v278 = vsub.f32 %v198, %v242
        %v279 = vsub.f32 %v199, %v242
        %v280 = vsub.f32 %v200, %v245
        %v281 = vsub.f32 %v201, %v245
        %v282 = vsub.f32 %v202, %v248
        %v283 = vsub.f32 %v203, %v248
        %v284 = vsub.f32 %v204, %v251
        %v285 = vsub.f32 %v205, %v251
        %v286 = vsub.f32 %v206, %v254
        %v287 = vsub.f32 %v207, %v254
        %v288 = vsub.f32 %v208, %v257
        %v289 = vsub.f32 %v209, %v257
        %v290 = vmul.f32 %v258, 1.442695
        %v291 = vpow.pop %v290
        %v292 = vmul.f32 %v259, 1.442695
        %v293 = vpow.pop %v292
        %v294 = vmul.f32 %v260, 1.442695
        %v295 = vpow.pop %v294
        %v296 = vmul.f32 %v261, 1.442695
        %v297 = vpow.pop %v296
        %v298 = vmul.f32 %v262, 1.442695
        %v299 = vpow.pop %v298
        %v300 = vmul.f32 %v263, 1.442695
        %v301 = vpow.pop %v300
        %v302 = vmul.f32 %v264, 1.442695
        %v303 = vpow.pop %v302
        %v304 = vmul.f32 %v265, 1.442695
        %v305 = vpow.pop %v304
        %v306 = vmul.f32 %v266, 1.442695
        %v307 = vpow.pop %v306
        %v308 = vmul.f32 %v267, 1.442695
        %v309 = vpow.pop %v308
        %v310 = vmul.f32 %v268, 1.442695
        %v311 = vpow.pop %v310
        %v312 = vmul.f32 %v269, 1.442695
        %v313 = vpow.pop %v312
        %v314 = vmul.f32 %v270, 1.442695
        %v315 = vpow.pop %v314
        %v316 = vmul.f32 %v271, 1.442695
        %v317 = vpow.pop %v316
        %v318 = vmul.f32 %v272, 1.442695
        %v319 = vpow.pop %v318
        %v320 = vmul.f32 %v273, 1.442695
        %v321 = vpow.pop %v320
        %v322 = vmul.f32 %v274, 1.442695
        %v323 = vpow.pop %v322
        %v324 = vmul.f32 %v275, 1.442695
        %v325 = vpow.pop %v324
        %v326 = vmul.f32 %v276, 1.442695
        %v327 = vpow.pop %v326
        %v328 = vmul.f32 %v277, 1.442695
        %v329 = vpow.pop %v328
        %v330 = vmul.f32 %v278, 1.442695
        %v331 = vpow.pop %v330
        %v332 = vmul.f32 %v279, 1.442695
        %v333 = vpow.pop %v332
        %v334 = vmul.f32 %v280, 1.442695
        %v335 = vpow.pop %v334
        %v336 = vmul.f32 %v281, 1.442695
        %v337 = vpow.pop %v336
        %v338 = vmul.f32 %v282, 1.442695
        %v339 = vpow.pop %v338
        %v340 = vmul.f32 %v283, 1.442695
        %v341 = vpow.pop %v340
        %v342 = vmul.f32 %v284, 1.442695
        %v343 = vpow.pop %v342
        %v344 = vmul.f32 %v285, 1.442695
        %v345 = vpow.pop %v344
        %v346 = vmul.f32 %v286, 1.442695
        %v347 = vpow.pop %v346
        %v348 = vmul.f32 %v287, 1.442695
        %v349 = vpow.pop %v348
        %v350 = vmul.f32 %v288, 1.442695
        %v351 = vpow.pop %v350
        %v352 = vmul.f32 %v289, 1.442695
        %v353 = vpow.pop %v352
        %v354 = vadd.f32 %v291, %v293
        %355 = vadd.xlane.f32.xlu0 %v354
        %v356 = vpop.xlane.xlu0 %355
        %v357 = vadd.f32 %v295, %v297
        %358 = vadd.xlane.f32.xlu0 %v357
        %v359 = vpop.xlane.xlu0 %358
        %v360 = vadd.f32 %v299, %v301
        %361 = vadd.xlane.f32.xlu0 %v360
        %v362 = vpop.xlane.xlu0 %361
        %v363 = vadd.f32 %v303, %v305
        %364 = vadd.xlane.f32.xlu0 %v363
        %v365 = vpop.xlane.xlu0 %364
        %v366 = vadd.f32 %v307, %v309
        %367 = vadd.xlane.f32.xlu0 %v366
        %v368 = vpop.xlane.xlu0 %367
        %v369 = vadd.f32 %v311, %v313
        %370 = vadd.xlane.f32.xlu0 %v369
        %v371 = vpop.xlane.xlu0 %370
        %v372 = vadd.f32 %v315, %v317
        %373 = vadd.xlane.f32.xlu0 %v372
        %v374 = vpop.xlane.xlu0 %373
        %v375 = vadd.f32 %v319, %v321
        %376 = vadd.xlane.f32.xlu0 %v375
        %v377 = vpop.xlane.xlu0 %376
        %v378 = vadd.f32 %v323, %v325
        %379 = vadd.xlane.f32.xlu0 %v378
        %v380 = vpop.xlane.xlu0 %379
        %v381 = vadd.f32 %v327, %v329
        %382 = vadd.xlane.f32.xlu0 %v381
        %v383 = vpop.xlane.xlu0 %382
        %v384 = vadd.f32 %v331, %v333
        %385 = vadd.xlane.f32.xlu0 %v384
        %v386 = vpop.xlane.xlu0 %385
        %v387 = vadd.f32 %v335, %v337
        %388 = vadd.xlane.f32.xlu0 %v387
        %v389 = vpop.xlane.xlu0 %388
        %v390 = vadd.f32 %v339, %v341
        %391 = vadd.xlane.f32.xlu0 %v390
        %v392 = vpop.xlane.xlu0 %391
        %v393 = vadd.f32 %v343, %v345
        %394 = vadd.xlane.f32.xlu0 %v393
        %v395 = vpop.xlane.xlu0 %394
        %v396 = vadd.f32 %v347, %v349
        %397 = vadd.xlane.f32.xlu0 %v396
        %v398 = vpop.xlane.xlu0 %397
        %v399 = vadd.f32 %v351, %v353
        %400 = vadd.xlane.f32.xlu0 %v399
        %v401 = vpop.xlane.xlu0 %400
        %v402 = vrcp.pop %v356
        %v403 = vrcp.pop %v359
        %v404 = vrcp.pop %v362
        %v405 = vrcp.pop %v365
        %v406 = vrcp.pop %v368
        %v407 = vrcp.pop %v371
        %v408 = vrcp.pop %v374
        %v409 = vrcp.pop %v377
        %v410 = vrcp.pop %v380
        %v411 = vrcp.pop %v383
        %v412 = vrcp.pop %v386
        %v413 = vrcp.pop %v389
        %v414 = vrcp.pop %v392
        %v415 = vrcp.pop %v395
        %v416 = vrcp.pop %v398
        %v417 = vrcp.pop %v401
        %v418 = vmul.f32 %v356, %v402
        %v419 = vmul.f32 %v359, %v403
        %v420 = vmul.f32 %v362, %v404
        %v421 = vmul.f32 %v365, %v405
        %v422 = vmul.f32 %v368, %v406
        %v423 = vmul.f32 %v371, %v407
        %v424 = vmul.f32 %v374, %v408
        %v425 = vmul.f32 %v377, %v409
        %v426 = vmul.f32 %v380, %v410
        %v427 = vmul.f32 %v383, %v411
        %v428 = vmul.f32 %v386, %v412
        %v429 = vmul.f32 %v389, %v413
        %v430 = vmul.f32 %v392, %v414
        %v431 = vmul.f32 %v395, %v415
        %v432 = vmul.f32 %v398, %v416
        %v433 = vmul.f32 %v401, %v417
        %v434 = vsub.f32 2.0, %v418
        %v435 = vsub.f32 2.0, %v419
        %v436 = vsub.f32 2.0, %v420
        %v437 = vsub.f32 2.0, %v421
        %v438 = vsub.f32 2.0, %v422
        %v439 = vsub.f32 2.0, %v423
        %v440 = vsub.f32 2.0, %v424
        %v441 = vsub.f32 2.0, %v425
        %v442 = vsub.f32 2.0, %v426
        %v443 = vsub.f32 2.0, %v427
        %v444 = vsub.f32 2.0, %v428
        %v445 = vsub.f32 2.0, %v429
        %v446 = vsub.f32 2.0, %v430
        %v447 = vsub.f32 2.0, %v431
        %v448 = vsub.f32 2.0, %v432
        %v449 = vsub.f32 2.0, %v433
        %v450 = vmul.f32 %v402, %v434
        %v451 = vmul.f32 %v403, %v435
        %v452 = vmul.f32 %v404, %v436
        %v453 = vmul.f32 %v405, %v437
        %v454 = vmul.f32 %v406, %v438
        %v455 = vmul.f32 %v407, %v439
        %v456 = vmul.f32 %v408, %v440
        %v457 = vmul.f32 %v409, %v441
        %v458 = vmul.f32 %v410, %v442
        %v459 = vmul.f32 %v411, %v443
        %v460 = vmul.f32 %v412, %v444
        %v461 = vmul.f32 %v413, %v445
        %v462 = vmul.f32 %v414, %v446
        %v463 = vmul.f32 %v415, %v447
        %v464 = vmul.f32 %v416, %v448
        %v465 = vmul.f32 %v417, %v449
        %v466 = vmul.f32 %v291, %v450
        %v467 = vmul.f32 %v293, %v450
        %v468 = vmul.f32 %v295, %v451
        %v469 = vmul.f32 %v297, %v451
        %v470 = vmul.f32 %v299, %v452
        %v471 = vmul.f32 %v301, %v452
        %v472 = vmul.f32 %v303, %v453
        %v473 = vmul.f32 %v305, %v453
        %v474 = vmul.f32 %v307, %v454
        %v475 = vmul.f32 %v309, %v454
        %v476 = vmul.f32 %v311, %v455
        %v477 = vmul.f32 %v313, %v455
        %v478 = vmul.f32 %v315, %v456
        %v479 = vmul.f32 %v317, %v456
        %v480 = vmul.f32 %v319, %v457
        %v481 = vmul.f32 %v321, %v457
        %v482 = vmul.f32 %v323, %v458
        %v483 = vmul.f32 %v325, %v458
        %v484 = vmul.f32 %v327, %v459
        %v485 = vmul.f32 %v329, %v459
        %v486 = vmul.f32 %v331, %v460
        %v487 = vmul.f32 %v333, %v460
        %v488 = vmul.f32 %v335, %v461
        %v489 = vmul.f32 %v337, %v461
        %v490 = vmul.f32 %v339, %v462
        %v491 = vmul.f32 %v341, %v462
        %v492 = vmul.f32 %v343, %v463
        %v493 = vmul.f32 %v345, %v463
        %v494 = vmul.f32 %v347, %v464
        %v495 = vmul.f32 %v349, %v464
        %v496 = vmul.f32 %v351, %v465
        %v497 = vmul.f32 %v353, %v465
        %s498 = smul.u32 %s20, 128
        %s499 = sshra.s32 %s498, 7
        %s500 = sand.u32 %s498, 127
        %s501 = smul.addr %s499, 8
        %s502 = scalar_lea.vmem %s153, %s501 [#allocation2]
        %v503 = vld [vmem:[%s502] sm:$0xff]
        %v504 = vld [vmem:[%s502 + $0x10] sm:$0xff]
        %v505 = vld [vmem:[%s502 + $0x20] sm:$0xff]
        %v506 = vld [vmem:[%s502 + $0x30] sm:$0xff]
        %v507 = vld [vmem:[%s502 + $0x40] sm:$0xff]
        %v508 = vld [vmem:[%s502 + $0x50] sm:$0xff]
        %v509 = vld [vmem:[%s502 + $0x60] sm:$0xff]
        %v510 = vld [vmem:[%s502 + $0x70] sm:$0xff]
        %v511 = vld [vmem:[%s502 + $0x80] sm:$0xff]
        %v512 = vld [vmem:[%s502 + $0x90] sm:$0xff]
        %v513 = vld [vmem:[%s502 + $0xa0] sm:$0xff]
        %v514 = vld [vmem:[%s502 + $0xb0] sm:$0xff]
        %v515 = vld [vmem:[%s502 + $0xc0] sm:$0xff]
        %v516 = vld [vmem:[%s502 + $0xd0] sm:$0xff]
        %v517 = vld [vmem:[%s502 + $0xe0] sm:$0xff]
        %v518 = vld [vmem:[%s502 + $0xf0] sm:$0xff]
        %v519 = vld [vmem:[#allocation5] sm:$0xff]
        %v520 = vld [vmem:[#allocation5 + $0x8] sm:$0xff]
        %v521 = vld [vmem:[#allocation5 + $0x10] sm:$0xff]
        %v522 = vld [vmem:[#allocation5 + $0x18] sm:$0xff]
        %v523 = vld [vmem:[#allocation5 + $0x20] sm:$0xff]
        %v524 = vld [vmem:[#allocation5 + $0x28] sm:$0xff]
        %v525 = vld [vmem:[#allocation5 + $0x30] sm:$0xff]
        %v526 = vld [vmem:[#allocation5 + $0x38] sm:$0xff]
        %v527 = vld [vmem:[#allocation5 + $0x40] sm:$0xff]
        %v528 = vld [vmem:[#allocation5 + $0x48] sm:$0xff]
        %v529 = vld [vmem:[#allocation5 + $0x50] sm:$0xff]
        %v530 = vld [vmem:[#allocation5 + $0x58] sm:$0xff]
        %v531 = vld [vmem:[#allocation5 + $0x60] sm:$0xff]
        %v532 = vld [vmem:[#allocation5 + $0x68] sm:$0xff]
        %v533 = vld [vmem:[#allocation5 + $0x70] sm:$0xff]
        %v534 = vld [vmem:[#allocation5 + $0x78] sm:$0xff]
        %v535 = vmul.f32 %v503, %v519
        %v536 = vmul.f32 %v504, %v520
        %v537 = vmul.f32 %v505, %v521
        %v538 = vmul.f32 %v506, %v522
        %v539 = vmul.f32 %v507, %v523
        %v540 = vmul.f32 %v508, %v524
        %v541 = vmul.f32 %v509, %v525
        %v542 = vmul.f32 %v510, %v526
        %v543 = vmul.f32 %v511, %v527
        %v544 = vmul.f32 %v512, %v528
        %v545 = vmul.f32 %v513, %v529
        %v546 = vmul.f32 %v514, %v530
        %v547 = vmul.f32 %v515, %v531
        %v548 = vmul.f32 %v516, %v532
        %v549 = vmul.f32 %v517, %v533
        %v550 = vmul.f32 %v518, %v534
        %551 = vadd.xlane.f32.xlu0 %v535
        %v552 = vpop.xlane.xlu0 %551
        %553 = vadd.xlane.f32.xlu0 %v536
        %v554 = vpop.xlane.xlu0 %553
        %555 = vadd.xlane.f32.xlu0 %v537
        %v556 = vpop.xlane.xlu0 %555
        %557 = vadd.xlane.f32.xlu0 %v538
        %v558 = vpop.xlane.xlu0 %557
        %559 = vadd.xlane.f32.xlu0 %v539
        %v560 = vpop.xlane.xlu0 %559
        %561 = vadd.xlane.f32.xlu0 %v540
        %v562 = vpop.xlane.xlu0 %561
        %563 = vadd.xlane.f32.xlu0 %v541
        %v564 = vpop.xlane.xlu0 %563
        %565 = vadd.xlane.f32.xlu0 %v542
        %v566 = vpop.xlane.xlu0 %565
        %567 = vadd.xlane.f32.xlu0 %v543
        %v568 = vpop.xlane.xlu0 %567
        %569 = vadd.xlane.f32.xlu0 %v544
        %v570 = vpop.xlane.xlu0 %569
        %571 = vadd.xlane.f32.xlu0 %v545
        %v572 = vpop.xlane.xlu0 %571
        %573 = vadd.xlane.f32.xlu0 %v546
        %v574 = vpop.xlane.xlu0 %573
        %575 = vadd.xlane.f32.xlu0 %v547
        %v576 = vpop.xlane.xlu0 %575
        %577 = vadd.xlane.f32.xlu0 %v548
        %v578 = vpop.xlane.xlu0 %577
        %579 = vadd.xlane.f32.xlu0 %v549
        %v580 = vpop.xlane.xlu0 %579
        %581 = vadd.xlane.f32.xlu0 %v550
        %v582 = vpop.xlane.xlu0 %581
        %v583 = vsub.f32 %v552, %v212
        %v584 = vsub.f32 %v554, %v215
        %v585 = vsub.f32 %v556, %v218
        %v586 = vsub.f32 %v558, %v221
        %v587 = vsub.f32 %v560, %v224
        %v588 = vsub.f32 %v562, %v227
        %v589 = vsub.f32 %v564, %v230
        %v590 = vsub.f32 %v566, %v233
        %v591 = vsub.f32 %v568, %v236
        %v592 = vsub.f32 %v570, %v239
        %v593 = vsub.f32 %v572, %v242
        %v594 = vsub.f32 %v574, %v245
        %v595 = vsub.f32 %v576, %v248
        %v596 = vsub.f32 %v578, %v251
        %v597 = vsub.f32 %v580, %v254
        %v598 = vsub.f32 %v582, %v257
        %v599 = vmul.f32 %v583, 1.442695
        %v600 = vpow.pop %v599
        %v601 = vmul.f32 %v584, 1.442695
        %v602 = vpow.pop %v601
        %v603 = vmul.f32 %v585, 1.442695
        %v604 = vpow.pop %v603
        %v605 = vmul.f32 %v586, 1.442695
        %v606 = vpow.pop %v605
        %v607 = vmul.f32 %v587, 1.442695
        %v608 = vpow.pop %v607
        %v609 = vmul.f32 %v588, 1.442695
        %v610 = vpow.pop %v609
        %v611 = vmul.f32 %v589, 1.442695
        %v612 = vpow.pop %v611
        %v613 = vmul.f32 %v590, 1.442695
        %v614 = vpow.pop %v613
        %v615 = vmul.f32 %v591, 1.442695
        %v616 = vpow.pop %v615
        %v617 = vmul.f32 %v592, 1.442695
        %v618 = vpow.pop %v617
        %v619 = vmul.f32 %v593, 1.442695
        %v620 = vpow.pop %v619
        %v621 = vmul.f32 %v594, 1.442695
        %v622 = vpow.pop %v621
        %v623 = vmul.f32 %v595, 1.442695
        %v624 = vpow.pop %v623
        %v625 = vmul.f32 %v596, 1.442695
        %v626 = vpow.pop %v625
        %v627 = vmul.f32 %v597, 1.442695
        %v628 = vpow.pop %v627
        %v629 = vmul.f32 %v598, 1.442695
        %v630 = vpow.pop %v629
        %v631 = vmax.f32 %v600, 1e-30
        %v632 = vmax.f32 %v602, 1e-30
        %v633 = vmax.f32 %v604, 1e-30
        %v634 = vmax.f32 %v606, 1e-30
        %v635 = vmax.f32 %v608, 1e-30
        %v636 = vmax.f32 %v610, 1e-30
        %v637 = vmax.f32 %v612, 1e-30
        %v638 = vmax.f32 %v614, 1e-30
        %v639 = vmax.f32 %v616, 1e-30
        %v640 = vmax.f32 %v618, 1e-30
        %v641 = vmax.f32 %v620, 1e-30
        %v642 = vmax.f32 %v622, 1e-30
        %v643 = vmax.f32 %v624, 1e-30
        %v644 = vmax.f32 %v626, 1e-30
        %v645 = vmax.f32 %v628, 1e-30
        %v646 = vmax.f32 %v630, 1e-30
        %v647 = vadd.f32 %v291, %v631
        %v648 = vadd.f32 %v293, %v631
        %v649 = vadd.f32 %v295, %v632
        %v650 = vadd.f32 %v297, %v632
        %v651 = vadd.f32 %v299, %v633
        %v652 = vadd.f32 %v301, %v633
        %v653 = vadd.f32 %v303, %v634
        %v654 = vadd.f32 %v305, %v634
        %v655 = vadd.f32 %v307, %v635
        %v656 = vadd.f32 %v309, %v635
        %v657 = vadd.f32 %v311, %v636
        %v658 = vadd.f32 %v313, %v636
        %v659 = vadd.f32 %v315, %v637
        %v660 = vadd.f32 %v317, %v637
        %v661 = vadd.f32 %v319, %v638
        %v662 = vadd.f32 %v321, %v638
        %v663 = vadd.f32 %v323, %v639
        %v664 = vadd.f32 %v325, %v639
        %v665 = vadd.f32 %v327, %v640
        %v666 = vadd.f32 %v329, %v640
        %v667 = vadd.f32 %v331, %v641
        %v668 = vadd.f32 %v333, %v641
        %v669 = vadd.f32 %v335, %v642
        %v670 = vadd.f32 %v337, %v642
        %v671 = vadd.f32 %v339, %v643
        %v672 = vadd.f32 %v341, %v643
        %v673 = vadd.f32 %v343, %v644
        %v674 = vadd.f32 %v345, %v644
        %v675 = vadd.f32 %v347, %v645
        %v676 = vadd.f32 %v349, %v645
        %v677 = vadd.f32 %v351, %v646
        %v678 = vadd.f32 %v353, %v646
        %v679 = vrcp.pop %v647
        %v680 = vrcp.pop %v648
        %v681 = vrcp.pop %v649
        %v682 = vrcp.pop %v650
        %v683 = vrcp.pop %v651
        %v684 = vrcp.pop %v652
        %v685 = vrcp.pop %v653
        %v686 = vrcp.pop %v654
        %v687 = vrcp.pop %v655
        %v688 = vrcp.pop %v656
        %v689 = vrcp.pop %v657
        %v690 = vrcp.pop %v658
        %v691 = vrcp.pop %v659
        %v692 = vrcp.pop %v660
        %v693 = vrcp.pop %v661
        %v694 = vrcp.pop %v662
        %v695 = vrcp.pop %v663
        %v696 = vrcp.pop %v664
        %v697 = vrcp.pop %v665
        %v698 = vrcp.pop %v666
        %v699 = vrcp.pop %v667
        %v700 = vrcp.pop %v668
        %v701 = vrcp.pop %v669
        %v702 = vrcp.pop %v670
        %v703 = vrcp.pop %v671
        %v704 = vrcp.pop %v672
        %v705 = vrcp.pop %v673
        %v706 = vrcp.pop %v674
        %v707 = vrcp.pop %v675
        %v708 = vrcp.pop %v676
        %v709 = vrcp.pop %v677
        %v710 = vrcp.pop %v678
        %v711 = vmul.f32 %v291, %v679
        %v712 = vmul.f32 %v293, %v680
        %v713 = vmul.f32 %v295, %v681
        %v714 = vmul.f32 %v297, %v682
        %v715 = vmul.f32 %v299, %v683
        %v716 = vmul.f32 %v301, %v684
        %v717 = vmul.f32 %v303, %v685
        %v718 = vmul.f32 %v305, %v686
        %v719 = vmul.f32 %v307, %v687
        %v720 = vmul.f32 %v309, %v688
        %v721 = vmul.f32 %v311, %v689
        %v722 = vmul.f32 %v313, %v690
        %v723 = vmul.f32 %v315, %v691
        %v724 = vmul.f32 %v317, %v692
        %v725 = vmul.f32 %v319, %v693
        %v726 = vmul.f32 %v321, %v694
        %v727 = vmul.f32 %v323, %v695
        %v728 = vmul.f32 %v325, %v696
        %v729 = vmul.f32 %v327, %v697
        %v730 = vmul.f32 %v329, %v698
        %v731 = vmul.f32 %v331, %v699
        %v732 = vmul.f32 %v333, %v700
        %v733 = vmul.f32 %v335, %v701
        %v734 = vmul.f32 %v337, %v702
        %v735 = vmul.f32 %v339, %v703
        %v736 = vmul.f32 %v341, %v704
        %v737 = vmul.f32 %v343, %v705
        %v738 = vmul.f32 %v345, %v706
        %v739 = vmul.f32 %v347, %v707
        %v740 = vmul.f32 %v349, %v708
        %v741 = vmul.f32 %v351, %v709
        %v742 = vmul.f32 %v353, %v710
        %v743 = vmul.f32 %v178, %v178
        %v744 = vmul.f32 %v179, %v179
        %v745 = vmul.f32 %v180, %v180
        %v746 = vmul.f32 %v181, %v181
        %v747 = vmul.f32 %v182, %v182
        %v748 = vmul.f32 %v183, %v183
        %v749 = vmul.f32 %v184, %v184
        %v750 = vmul.f32 %v185, %v185
        %v751 = vmul.f32 %v186, %v186
        %v752 = vmul.f32 %v187, %v187
        %v753 = vmul.f32 %v188, %v188
        %v754 = vmul.f32 %v189, %v189
        %v755 = vmul.f32 %v190, %v190
        %v756 = vmul.f32 %v191, %v191
        %v757 = vmul.f32 %v192, %v192
        %v758 = vmul.f32 %v193, %v193
        %v759 = vmul.f32 %v194, %v194
        %v760 = vmul.f32 %v195, %v195
        %v761 = vmul.f32 %v196, %v196
        %v762 = vmul.f32 %v197, %v197
        %v763 = vmul.f32 %v198, %v198
        %v764 = vmul.f32 %v199, %v199
        %v765 = vmul.f32 %v200, %v200
        %v766 = vmul.f32 %v201, %v201
        %v767 = vmul.f32 %v202, %v202
        %v768 = vmul.f32 %v203, %v203
        %v769 = vmul.f32 %v204, %v204
        %v770 = vmul.f32 %v205, %v205
        %v771 = vmul.f32 %v206, %v206
        %v772 = vmul.f32 %v207, %v207
        %v773 = vmul.f32 %v208, %v208
        %v774 = vmul.f32 %v209, %v209
        %v775 = vmul.f32 %v743, 0.5
        %v776 = vmul.f32 %v744, 0.5
        %v777 = vmul.f32 %v745, 0.5
        %v778 = vmul.f32 %v746, 0.5
        %v779 = vmul.f32 %v747, 0.5
        %v780 = vmul.f32 %v748, 0.5
        %v781 = vmul.f32 %v749, 0.5
        %v782 = vmul.f32 %v750, 0.5
        %v783 = vmul.f32 %v751, 0.5
        %v784 = vmul.f32 %v752, 0.5
        %v785 = vmul.f32 %v753, 0.5
        %v786 = vmul.f32 %v754, 0.5
        %v787 = vmul.f32 %v755, 0.5
        %v788 = vmul.f32 %v756, 0.5
        %v789 = vmul.f32 %v757, 0.5
        %v790 = vmul.f32 %v758, 0.5
        %v791 = vmul.f32 %v759, 0.5
        %v792 = vmul.f32 %v760, 0.5
        %v793 = vmul.f32 %v761, 0.5
        %v794 = vmul.f32 %v762, 0.5
        %v795 = vmul.f32 %v763, 0.5
        %v796 = vmul.f32 %v764, 0.5
        %v797 = vmul.f32 %v765, 0.5
        %v798 = vmul.f32 %v766, 0.5
        %v799 = vmul.f32 %v767, 0.5
        %v800 = vmul.f32 %v768, 0.5
        %v801 = vmul.f32 %v769, 0.5
        %v802 = vmul.f32 %v770, 0.5
        %v803 = vmul.f32 %v771, 0.5
        %v804 = vmul.f32 %v772, 0.5
        %v805 = vmul.f32 %v773, 0.5
        %v806 = vmul.f32 %v774, 0.5
        %v807 = vtanh.pop %v775
        %v808 = vtanh.pop %v776
        %v809 = vtanh.pop %v777
        %v810 = vtanh.pop %v778
        %v811 = vtanh.pop %v779
        %v812 = vtanh.pop %v780
        %v813 = vtanh.pop %v781
        %v814 = vtanh.pop %v782
        %v815 = vtanh.pop %v783
        %v816 = vtanh.pop %v784
        %v817 = vtanh.pop %v785
        %v818 = vtanh.pop %v786
        %v819 = vtanh.pop %v787
        %v820 = vtanh.pop %v788
        %v821 = vtanh.pop %v789
        %v822 = vtanh.pop %v790
        %v823 = vtanh.pop %v791
        %v824 = vtanh.pop %v792
        %v825 = vtanh.pop %v793
        %v826 = vtanh.pop %v794
        %v827 = vtanh.pop %v795
        %v828 = vtanh.pop %v796
        %v829 = vtanh.pop %v797
        %v830 = vtanh.pop %v798
        %v831 = vtanh.pop %v799
        %v832 = vtanh.pop %v800
        %v833 = vtanh.pop %v801
        %v834 = vtanh.pop %v802
        %v835 = vtanh.pop %v803
        %v836 = vtanh.pop %v804
        %v837 = vtanh.pop %v805
        %v838 = vtanh.pop %v806
        %v839 = vmul.f32 %v807, 0.5
        %v840 = vmul.f32 %v808, 0.5
        %v841 = vmul.f32 %v809, 0.5
        %v842 = vmul.f32 %v810, 0.5
        %v843 = vmul.f32 %v811, 0.5
        %v844 = vmul.f32 %v812, 0.5
        %v845 = vmul.f32 %v813, 0.5
        %v846 = vmul.f32 %v814, 0.5
        %v847 = vmul.f32 %v815, 0.5
        %v848 = vmul.f32 %v816, 0.5
        %v849 = vmul.f32 %v817, 0.5
        %v850 = vmul.f32 %v818, 0.5
        %v851 = vmul.f32 %v819, 0.5
        %v852 = vmul.f32 %v820, 0.5
        %v853 = vmul.f32 %v821, 0.5
        %v854 = vmul.f32 %v822, 0.5
        %v855 = vmul.f32 %v823, 0.5
        %v856 = vmul.f32 %v824, 0.5
        %v857 = vmul.f32 %v825, 0.5
        %v858 = vmul.f32 %v826, 0.5
        %v859 = vmul.f32 %v827, 0.5
        %v860 = vmul.f32 %v828, 0.5
        %v861 = vmul.f32 %v829, 0.5
        %v862 = vmul.f32 %v830, 0.5
        %v863 = vmul.f32 %v831, 0.5
        %v864 = vmul.f32 %v832, 0.5
        %v865 = vmul.f32 %v833, 0.5
        %v866 = vmul.f32 %v834, 0.5
        %v867 = vmul.f32 %v835, 0.5
        %v868 = vmul.f32 %v836, 0.5
        %v869 = vmul.f32 %v837, 0.5
        %v870 = vmul.f32 %v838, 0.5
        %v871 = vadd.f32 %v839, 0.5
        %v872 = vadd.f32 %v840, 0.5
        %v873 = vadd.f32 %v841, 0.5
        %v874 = vadd.f32 %v842, 0.5
        %v875 = vadd.f32 %v843, 0.5
        %v876 = vadd.f32 %v844, 0.5
        %v877 = vadd.f32 %v845, 0.5
        %v878 = vadd.f32 %v846, 0.5
        %v879 = vadd.f32 %v847, 0.5
        %v880 = vadd.f32 %v848, 0.5
        %v881 = vadd.f32 %v849, 0.5
        %v882 = vadd.f32 %v850, 0.5
        %v883 = vadd.f32 %v851, 0.5
        %v884 = vadd.f32 %v852, 0.5
        %v885 = vadd.f32 %v853, 0.5
        %v886 = vadd.f32 %v854, 0.5
        %v887 = vadd.f32 %v855, 0.5
        %v888 = vadd.f32 %v856, 0.5
        %v889 = vadd.f32 %v857, 0.5
        %v890 = vadd.f32 %v858, 0.5
        %v891 = vadd.f32 %v859, 0.5
        %v892 = vadd.f32 %v860, 0.5
        %v893 = vadd.f32 %v861, 0.5
        %v894 = vadd.f32 %v862, 0.5
        %v895 = vadd.f32 %v863, 0.5
        %v896 = vadd.f32 %v864, 0.5
        %v897 = vadd.f32 %v865, 0.5
        %v898 = vadd.f32 %v866, 0.5
        %v899 = vadd.f32 %v867, 0.5
        %v900 = vadd.f32 %v868, 0.5
        %v901 = vadd.f32 %v869, 0.5
        %v902 = vadd.f32 %v870, 0.5
        %v903 = vadd.f32 %v711, %v871
        %v904 = vadd.f32 %v712, %v872
        %v905 = vadd.f32 %v713, %v873
        %v906 = vadd.f32 %v714, %v874
        %v907 = vadd.f32 %v715, %v875
        %v908 = vadd.f32 %v716, %v876
        %v909 = vadd.f32 %v717, %v877
        %v910 = vadd.f32 %v718, %v878
        %v911 = vadd.f32 %v719, %v879
        %v912 = vadd.f32 %v720, %v880
        %v913 = vadd.f32 %v721, %v881
        %v914 = vadd.f32 %v722, %v882
        %v915 = vadd.f32 %v723, %v883
        %v916 = vadd.f32 %v724, %v884
        %v917 = vadd.f32 %v725, %v885
        %v918 = vadd.f32 %v726, %v886
        %v919 = vadd.f32 %v727, %v887
        %v920 = vadd.f32 %v728, %v888
        %v921 = vadd.f32 %v729, %v889
        %v922 = vadd.f32 %v730, %v890
        %v923 = vadd.f32 %v731, %v891
        %v924 = vadd.f32 %v732, %v892
        %v925 = vadd.f32 %v733, %v893
        %v926 = vadd.f32 %v734, %v894
        %v927 = vadd.f32 %v735, %v895
        %v928 = vadd.f32 %v736, %v896
        %v929 = vadd.f32 %v737, %v897
        %v930 = vadd.f32 %v738, %v898
        %v931 = vadd.f32 %v739, %v899
        %v932 = vadd.f32 %v740, %v900
        %v933 = vadd.f32 %v741, %v901
        %v934 = vadd.f32 %v742, %v902
        %v935 = vmul.f32 %v466, %v903
        %v936 = vmul.f32 %v467, %v904
        %v937 = vmul.f32 %v468, %v905
        %v938 = vmul.f32 %v469, %v906
        %v939 = vmul.f32 %v470, %v907
        %v940 = vmul.f32 %v471, %v908
        %v941 = vmul.f32 %v472, %v909
        %v942 = vmul.f32 %v473, %v910
        %v943 = vmul.f32 %v474, %v911
        %v944 = vmul.f32 %v475, %v912
        %v945 = vmul.f32 %v476, %v913
        %v946 = vmul.f32 %v477, %v914
        %v947 = vmul.f32 %v478, %v915
        %v948 = vmul.f32 %v479, %v916
        %v949 = vmul.f32 %v480, %v917
        %v950 = vmul.f32 %v481, %v918
        %v951 = vmul.f32 %v482, %v919
        %v952 = vmul.f32 %v483, %v920
        %v953 = vmul.f32 %v484, %v921
        %v954 = vmul.f32 %v485, %v922
        %v955 = vmul.f32 %v486, %v923
        %v956 = vmul.f32 %v487, %v924
        %v957 = vmul.f32 %v488, %v925
        %v958 = vmul.f32 %v489, %v926
        %v959 = vmul.f32 %v490, %v927
        %v960 = vmul.f32 %v491, %v928
        %v961 = vmul.f32 %v492, %v929
        %v962 = vmul.f32 %v493, %v930
        %v963 = vmul.f32 %v494, %v931
        %v964 = vmul.f32 %v495, %v932
        %v965 = vmul.f32 %v496, %v933
        %v966 = vmul.f32 %v497, %v934
        %v967 = vadd.f32 %v935, %v936
        %968 = vadd.xlane.f32.xlu0 %v967
        %v969 = vpop.xlane.xlu0 %968
        %v970 = vadd.f32 %v937, %v938
        %971 = vadd.xlane.f32.xlu0 %v970
        %v972 = vpop.xlane.xlu0 %971
        %v973 = vadd.f32 %v939, %v940
        %974 = vadd.xlane.f32.xlu0 %v973
        %v975 = vpop.xlane.xlu0 %974
        %v976 = vadd.f32 %v941, %v942
        %977 = vadd.xlane.f32.xlu0 %v976
        %v978 = vpop.xlane.xlu0 %977
        %v979 = vadd.f32 %v943, %v944
        %980 = vadd.xlane.f32.xlu0 %v979
        %v981 = vpop.xlane.xlu0 %980
        %v982 = vadd.f32 %v945, %v946
        %983 = vadd.xlane.f32.xlu0 %v982
        %v984 = vpop.xlane.xlu0 %983
        %v985 = vadd.f32 %v947, %v948
        %986 = vadd.xlane.f32.xlu0 %v985
        %v987 = vpop.xlane.xlu0 %986
        %v988 = vadd.f32 %v949, %v950
        %989 = vadd.xlane.f32.xlu0 %v988
        %v990 = vpop.xlane.xlu0 %989
        %v991 = vadd.f32 %v951, %v952
        %992 = vadd.xlane.f32.xlu0 %v991
        %v993 = vpop.xlane.xlu0 %992
        %v994 = vadd.f32 %v953, %v954
        %995 = vadd.xlane.f32.xlu0 %v994
        %v996 = vpop.xlane.xlu0 %995
        %v997 = vadd.f32 %v955, %v956
        %998 = vadd.xlane.f32.xlu0 %v997
        %v999 = vpop.xlane.xlu0 %998
        %v1000 = vadd.f32 %v957, %v958
        %1001 = vadd.xlane.f32.xlu0 %v1000
        %v1002 = vpop.xlane.xlu0 %1001
        %v1003 = vadd.f32 %v959, %v960
        %1004 = vadd.xlane.f32.xlu0 %v1003
        %v1005 = vpop.xlane.xlu0 %1004
        %v1006 = vadd.f32 %v961, %v962
        %1007 = vadd.xlane.f32.xlu0 %v1006
        %v1008 = vpop.xlane.xlu0 %1007
        %v1009 = vadd.f32 %v963, %v964
        %1010 = vadd.xlane.f32.xlu0 %v1009
        %v1011 = vpop.xlane.xlu0 %1010
        %v1012 = vadd.f32 %v965, %v966
        %1013 = vadd.xlane.f32.xlu0 %v1012
        %v1014 = vpop.xlane.xlu0 %1013
        %v1015 = vadd.f32 %v969, %v972
        %v1016 = vadd.f32 %v1015, %v975
        %v1017 = vadd.f32 %v1016, %v978
        %v1018 = vadd.f32 %v1017, %v981
        %v1019 = vadd.f32 %v1018, %v984
        %v1020 = vadd.f32 %v1019, %v987
        %v1021 = vadd.f32 %v1020, %v990
        %v1022 = vadd.f32 %v1021, %v993
        %v1023 = vadd.f32 %v1022, %v996
        %v1024 = vadd.f32 %v1023, %v999
        %v1025 = vadd.f32 %v1024, %v1002
        %v1026 = vadd.f32 %v1025, %v1005
        %v1027 = vadd.f32 %v1026, %v1008
        %v1028 = vadd.f32 %v1027, %v1011
        %v1029 = vadd.f32 %v1028, %v1014
        %v1030 = vrot.slane %v1029, 4
        %v1031 = vadd.f32 %v1029, %v1030
        %v1032 = vrot.slane %v1031, 2
        %v1033 = vadd.f32 %v1031, %v1032
        %v1034 = vrot.slane %v1033, 1
        %v1035 = vadd.f32 %v1033, %v1034
        %1036 = vst [vmem:[%s176] sm:$0x1] %v1035
        %s1037 = sand.u32 %s75, 1
        %s1038 = scalar_lea.sflag [#allocation4], %s1037
        %s1039 = sand.u32 %s75, 1
        %s1040 = scalar_lea.vmem [#allocation7], %s1039
        // Predicated region
        $region37: #{tpu_custom_call.1} parent=27 // pred_check
          %p1041 = pneg %p85
        $region38: #{tpu_custom_call.1} parent=27 // pred_check_branch
          %1043 = sbr.rel (%p1041) target = $region40
        $region39: #{tpu_custom_call.1} parent=27 // pred_region
          %s1045 = ssub.s32 16, 16
          %1046 = vsyncadd %s1038, %s1045
          %s1047 = smul.addr %s20, 16
          %s1048 = scalar_lea.hbm %s2, %s1047
          %s1050 = sshll.u32 %s1040, 4
          %s1051 = int_to_ptr.vmem [resolvable:$true] %s1050
          %1053 = dma.vmem_to_hbm [thread:$0]  %s1051, 16, %s1048, %s1038
        $region40: #{tpu_custom_call.1} parent=27 // pred_fallthru
          _
      $region28: #{tpu_custom_call.1} parent=5 // pred_fallthru
        _
      %p1054 = scmp.le.s32.totalorder 2, %s15
      // Predicated region
      $region41: #{tpu_custom_call.1} parent=5 // pred_check
        %p1055 = pneg %p1054
      $region42: #{tpu_custom_call.1} parent=5 // pred_check_branch
        %1057 = sbr.rel (%p1055) target = $region44
      $region43: #{tpu_custom_call.1} parent=5 // pred_region
        %s1058 = ssub.s32 %s15, 2
        // Predicated region
        $region45: #{tpu_custom_call.1} parent=43 // pred_check
          %p1059 = pneg %p91
        $region46: #{tpu_custom_call.1} parent=43 // pred_check_branch
          %1061 = sbr.rel (%p1059) target = $region48
        $region47: #{tpu_custom_call.1} parent=43 // pred_region
          %s1062 = sand.u32 %s76, 1
          %s1063 = scalar_lea.sflag [#allocation4], %s1062
          %s1064 = sand.u32 %s76, 1
          %s1065 = scalar_lea.vmem [#allocation7], %s1064
          %1066 = dma.done %s1063, 16
        $region48: #{tpu_custom_call.1} parent=43 // pred_fallthru
          _
      $region44: #{tpu_custom_call.1} parent=5 // pred_fallthru
        _
    $region6: #{tpu_custom_call.1} parent=1 // loop_footer
      %s19 = sadd.s32 1, %s15
    $region7: #{tpu_custom_call.1} parent=1 // loop_footer_branch
      %14 = sbr.rel target = $region3
    $region8: #{tpu_custom_call.1} parent=1 // loop_exit
      _
    %1067 = vsyncpa [#allocation3], 1
    %s1068 = scalar_lea.sflag [#allocation3], 1
    %1069 = vsyncpa %s1068, 1
    %1070 = vsyncpa [#allocation6], 1
    %1071 = vsyncpa [#allocation4], 1
    %s1072 = scalar_lea.sflag [#allocation4], 1
    %1073 = vsyncpa %s1072, 1

</llo_original>
